<compile_context>
chip_gen: v5e
topology: v5e:2x2
jax: 0.10.0
libtpu: 0.0.40
codegen_flags: <defaults>
</compile_context>

<pallas_src>
import functools

import jax
import jax.numpy as jnp
from jax.experimental import pallas as pl
from jax.experimental.pallas import tpu as pltpu

K_IN = 28 * 28        # 784
H1 = 128
H2 = 64
N_OUT = 10


def _round_up(x, m):
    return (x + m - 1) // m * m


def mlp_kernel(x_ref, w1_ref, b1_ref, w2_ref, b2_ref, w3_ref, b3_ref, o_ref):
    # fc1 + ReLU: x is streamed as f32 (no wrapper cast round trip); cast to
    # bf16 only as the MXU operand, accumulate in f32.
    x = x_ref[...].astype(jnp.bfloat16)
    h1 = jnp.dot(x, w1_ref[...], preferred_element_type=jnp.float32)
    h1 = jnp.maximum(h1 + b1_ref[...], 0.0)
    # fc2 + ReLU
    h2 = jnp.dot(h1.astype(jnp.bfloat16), w2_ref[...],
                 preferred_element_type=jnp.float32)
    h2 = jnp.maximum(h2 + b2_ref[...], 0.0)
    # fc3 (logits), 10-wide output (block last dim == full array dim)
    out = jnp.dot(h2.astype(jnp.bfloat16), w3_ref[...],
                  preferred_element_type=jnp.float32)
    o_ref[...] = (out + b3_ref[...]).astype(o_ref.dtype)


def prepare_params(params):
    """One-time layout prep (hoisted out of the per-call path).

    PyTorch stores Linear weight as (out, in); transpose once so the kernel
    does plain x @ W, and cast weights to bf16 (MXU-native, half the bytes).
    """
    w1, b1, w2, b2, w3, b3 = params
    return (
        w1.T.astype(jnp.bfloat16),                 # (784, 128)
        b1.reshape(1, H1).astype(jnp.float32),
        w2.T.astype(jnp.bfloat16),                 # (128, 64)
        b2.reshape(1, H2).astype(jnp.float32),
        w3.T.astype(jnp.bfloat16),                 # (64, 10)
        b3.reshape(1, N_OUT).astype(jnp.float32),
    )


@functools.partial(jax.jit, static_argnames=("tile_b",))
def neural_net_forward(x_nchw, prepared, *, tile_b=1024):
    w1t, b1r, w2t, b2r, w3t, b3r = prepared
    batch = x_nchw.shape[0]
    x = x_nchw.reshape(batch, K_IN).astype(jnp.float32)   # torch .view(-1, 784)

    # Batch tile: multiple of 16 (bf16 sublane packing), capped at tile_b, and
    # small enough that the grid has >=2 steps when the batch allows it, so
    # the "parallel" grid axis shards across both v7x TensorCores.
    tb = max(16, min(tile_b, _round_up(pl.cdiv(batch, 2), 16)))
    grid = (pl.cdiv(batch, tb),)    # ragged last tile: Pallas masks it

    resident = lambda shape: pl.BlockSpec(shape, lambda i: (0,) * len(shape))
    # NOTE: pipeline_mode=pl.Buffered(1) on the resident specs would free a
    # few hundred KB of dead double-buffer VMEM; skipped as it is not needed
    # to fit VMEM and keeps the lowering path maximally conservative.

    flops = 2 * batch * (K_IN * H1 + H1 * H2 + H2 * N_OUT)
    bytes_accessed = (
        batch * K_IN * 4                                   # x (f32)
        + (K_IN * H1 + H1 * H2 + H2 * N_OUT) * 2           # weights (bf16)
        + (H1 + H2 + N_OUT) * 4                            # biases (f32)
        + batch * N_OUT * 4                                # logits (f32)
    )

    return pl.pallas_call(
        mlp_kernel,
        out_shape=jax.ShapeDtypeStruct((batch, N_OUT), jnp.float32),
        grid=grid,
        in_specs=[
            pl.BlockSpec((tb, K_IN), lambda i: (i, 0)),    # x: streamed on batch
            resident((K_IN, H1)),                          # w1 (resident)
            resident((1, H1)),                             # b1
            resident((H1, H2)),                            # w2
            resident((1, H2)),                             # b2
            resident((H2, N_OUT)),                         # w3
            resident((1, N_OUT)),                          # b3
        ],
        out_specs=pl.BlockSpec((tb, N_OUT), lambda i: (i, 0)),
        compiler_params=pltpu.CompilerParams(
            dimension_semantics=("parallel",)),            # 2-TC sharding on v7x
        cost_estimate=pl.CostEstimate(
            flops=flops, transcendentals=0, bytes_accessed=bytes_accessed),
    )(x, w1t, b1r, w2t, b2r, w3t, b3r)


def init_params(key):
    # Deterministic synthetic init (PyTorch-shaped: Linear weight = (out, in)).
    ks = jax.random.split(key, 6)

    def lin(kw, kb, fan_in, fan_out):
        bound = 1.0 / jnp.sqrt(fan_in)
        w = jax.random.uniform(kw, (fan_out, fan_in), jnp.float32, -bound, bound)
        b = jax.random.uniform(kb, (fan_out,), jnp.float32, -bound, bound)
        return w, b

    w1, b1 = lin(ks[0], ks[1], K_IN, H1)
    w2, b2 = lin(ks[2], ks[3], H1, H2)
    w3, b3 = lin(ks[4], ks[5], H2, N_OUT)
    return (w1, b1, w2, b2, w3, b3)


if __name__ == "__main__":
    key = jax.random.PRNGKey(0)
    k_params, k_x = jax.random.split(key)
    params = init_params(k_params)
    prepared = prepare_params(params)          # one-time weight layout prep

    batch = 8
    x = jax.random.normal(k_x, (batch, 1, 28, 28), jnp.float32)  # NCHW

    y = neural_net_forward(x, prepared)
    jax.block_until_ready(y)
    assert y.shape == (batch, N_OUT)

    # Reference mirroring the kernel's numerics (bf16 matmul operands,
    # f32 accumulation) — should match tightly.
    w1, b1, w2, b2, w3, b3 = params
    xr = x.reshape(batch, -1)
    xb = xr.astype(jnp.bfloat16)
    h1 = jnp.maximum(
        jnp.dot(xb, w1.T.astype(jnp.bfloat16),
                preferred_element_type=jnp.float32) + b1, 0.0)
    h2 = jnp.maximum(
        jnp.dot(h1.astype(jnp.bfloat16), w2.T.astype(jnp.bfloat16),
                preferred_element_type=jnp.float32) + b2, 0.0)
    ref_bf16 = jnp.dot(h2.astype(jnp.bfloat16), w3.T.astype(jnp.bfloat16),
                       preferred_element_type=jnp.float32) + b3
    assert jnp.allclose(y, ref_bf16, atol=1e-2, rtol=1e-2), \
        float(jnp.max(jnp.abs(y - ref_bf16)))

    # Loose check against the pure-f32 PyTorch-equivalent forward.
    ref32 = jnp.maximum(xr @ w1.T + b1, 0.0)
    ref32 = jnp.maximum(ref32 @ w2.T + b2, 0.0)
    ref32 = ref32 @ w3.T + b3
    assert jnp.allclose(y, ref32, atol=5e-2, rtol=5e-2), \
        float(jnp.max(jnp.abs(y - ref32)))

    print("KERNEL_OK")
</pallas_src>

<mosaic_0001>
module attributes {stable_mosaic.version = 11 : i64} {
  func.func @mlp_kernel(%arg0: i32, %arg1: memref<16x784xf32, #tpu.memory_space<vmem>>, %arg2: memref<784x128xbf16, #tpu.memory_space<vmem>>, %arg3: memref<1x128xf32, #tpu.memory_space<vmem>>, %arg4: memref<128x64xbf16, #tpu.memory_space<vmem>>, %arg5: memref<1x64xf32, #tpu.memory_space<vmem>>, %arg6: memref<64x10xbf16, #tpu.memory_space<vmem>>, %arg7: memref<1x10xf32, #tpu.memory_space<vmem>>, %arg8: memref<16x10xf32, #tpu.memory_space<vmem>>) attributes {dimension_semantics = [#tpu.dimension_semantics<parallel>], iteration_bounds = array<i64: 1>, scalar_prefetch = 0 : i64, scratch_operands = 0 : i64, tpu.core_type = #tpu.core_type<tc>, window_params = [{transform_indices = @transform_0, window_bounds = array<i64: 16, 784>}, {pipeline_mode = #tpu.pipeline_mode<synchronous>, transform_indices = @transform_1, window_bounds = array<i64: 784, 128>}, {pipeline_mode = #tpu.pipeline_mode<synchronous>, transform_indices = @transform_2, window_bounds = array<i64: 1, 128>}, {pipeline_mode = #tpu.pipeline_mode<synchronous>, transform_indices = @transform_3, window_bounds = array<i64: 128, 64>}, {pipeline_mode = #tpu.pipeline_mode<synchronous>, transform_indices = @transform_4, window_bounds = array<i64: 1, 64>}, {pipeline_mode = #tpu.pipeline_mode<synchronous>, transform_indices = @transform_5, window_bounds = array<i64: 64, 10>}, {pipeline_mode = #tpu.pipeline_mode<synchronous>, transform_indices = @transform_6, window_bounds = array<i64: 1, 10>}, {transform_indices = @transform_7, window_bounds = array<i64: 16, 10>}]} {
    %c0 = arith.constant 0 : index
    %c0_0 = arith.constant 0 : index
    %0 = vector.load %arg1[%c0, %c0_0] : memref<16x784xf32, #tpu.memory_space<vmem>>, vector<16x784xf32>
    %1 = arith.truncf %0 : vector<16x784xf32> to vector<16x784xbf16>
    %c0_1 = arith.constant 0 : index
    %c0_2 = arith.constant 0 : index
    %2 = vector.load %arg2[%c0_1, %c0_2] : memref<784x128xbf16, #tpu.memory_space<vmem>>, vector<784x128xbf16>
    %cst = arith.constant dense<0.000000e+00> : vector<16x128xf32>
    %3 = tpu.matmul %1, %2, %cst {dimension_numbers = #tpu.dot_dimension_numbers<[1], [0], [0], [1], [0, 0, 1, 1], [], []>} : vector<16x784xbf16>, vector<784x128xbf16>, vector<16x128xf32> -> vector<16x128xf32>
    %c0_3 = arith.constant 0 : index
    %c0_4 = arith.constant 0 : index
    %4 = vector.load %arg3[%c0_3, %c0_4] : memref<1x128xf32, #tpu.memory_space<vmem>>, vector<1x128xf32>
    %5 = vector.broadcast %4 : vector<1x128xf32> to vector<16x128xf32>
    %6 = arith.addf %3, %5 : vector<16x128xf32>
    %cst_5 = arith.constant 0.000000e+00 : f32
    %7 = vector.broadcast %cst_5 : f32 to vector<16x128xf32>
    %8 = arith.maximumf %6, %7 : vector<16x128xf32>
    %9 = arith.truncf %8 : vector<16x128xf32> to vector<16x128xbf16>
    %c0_6 = arith.constant 0 : index
    %c0_7 = arith.constant 0 : index
    %10 = vector.load %arg4[%c0_6, %c0_7] : memref<128x64xbf16, #tpu.memory_space<vmem>>, vector<128x64xbf16>
    %cst_8 = arith.constant dense<0.000000e+00> : vector<16x64xf32>
    %11 = tpu.matmul %9, %10, %cst_8 {dimension_numbers = #tpu.dot_dimension_numbers<[1], [0], [0], [1], [0, 0, 1, 1], [], []>} : vector<16x128xbf16>, vector<128x64xbf16>, vector<16x64xf32> -> vector<16x64xf32>
    %c0_9 = arith.constant 0 : index
    %c0_10 = arith.constant 0 : index
    %12 = vector.load %arg5[%c0_9, %c0_10] : memref<1x64xf32, #tpu.memory_space<vmem>>, vector<1x64xf32>
    %13 = vector.broadcast %12 : vector<1x64xf32> to vector<16x64xf32>
    %14 = arith.addf %11, %13 : vector<16x64xf32>
    %cst_11 = arith.constant 0.000000e+00 : f32
    %15 = vector.broadcast %cst_11 : f32 to vector<16x64xf32>
    %16 = arith.maximumf %14, %15 : vector<16x64xf32>
    %17 = arith.truncf %16 : vector<16x64xf32> to vector<16x64xbf16>
    %c0_12 = arith.constant 0 : index
    %c0_13 = arith.constant 0 : index
    %18 = vector.load %arg6[%c0_12, %c0_13] : memref<64x10xbf16, #tpu.memory_space<vmem>>, vector<64x10xbf16>
    %cst_14 = arith.constant dense<0.000000e+00> : vector<16x10xf32>
    %19 = tpu.matmul %17, %18, %cst_14 {dimension_numbers = #tpu.dot_dimension_numbers<[1], [0], [0], [1], [0, 0, 1, 1], [], []>} : vector<16x64xbf16>, vector<64x10xbf16>, vector<16x10xf32> -> vector<16x10xf32>
    %c0_15 = arith.constant 0 : index
    %c0_16 = arith.constant 0 : index
    %20 = vector.load %arg7[%c0_15, %c0_16] : memref<1x10xf32, #tpu.memory_space<vmem>>, vector<1x10xf32>
    %21 = vector.broadcast %20 : vector<1x10xf32> to vector<16x10xf32>
    %22 = arith.addf %19, %21 : vector<16x10xf32>
    %c0_17 = arith.constant 0 : index
    %c0_18 = arith.constant 0 : index
    %23 = vector.load %arg8[%c0_17, %c0_18] : memref<16x10xf32, #tpu.memory_space<vmem>>, vector<16x10xf32>
    tpu.vector_store %arg8[%c0_17, %c0_18], %22 {strides = array<i32>} : memref<16x10xf32, #tpu.memory_space<vmem>>, vector<16x10xf32>,
    return
  }
  func.func @transform_0(%arg0: i32) -> (i32, i32) {
    %c0_i32 = arith.constant 0 : i32
    %c0_i32_0 = arith.constant 0 : i32
    return %arg0, %c0_i32 : i32, i32
  }
  func.func @transform_1(%arg0: i32) -> (i32, i32) {
    %c0_i32 = arith.constant 0 : i32
    %c0_i32_0 = arith.constant 0 : i32
    %c0_i32_1 = arith.constant 0 : i32
    return %c0_i32, %c0_i32_0 : i32, i32
  }
  func.func @transform_2(%arg0: i32) -> (i32, i32) {
    %c0_i32 = arith.constant 0 : i32
    %c0_i32_0 = arith.constant 0 : i32
    %c0_i32_1 = arith.constant 0 : i32
    return %c0_i32, %c0_i32_0 : i32, i32
  }
  func.func @transform_3(%arg0: i32) -> (i32, i32) {
    %c0_i32 = arith.constant 0 : i32
    %c0_i32_0 = arith.constant 0 : i32
    %c0_i32_1 = arith.constant 0 : i32
    return %c0_i32, %c0_i32_0 : i32, i32
  }
  func.func @transform_4(%arg0: i32) -> (i32, i32) {
    %c0_i32 = arith.constant 0 : i32
    %c0_i32_0 = arith.constant 0 : i32
    %c0_i32_1 = arith.constant 0 : i32
    return %c0_i32, %c0_i32_0 : i32, i32
  }
  func.func @transform_5(%arg0: i32) -> (i32, i32) {
    %c0_i32 = arith.constant 0 : i32
    %c0_i32_0 = arith.constant 0 : i32
    %c0_i32_1 = arith.constant 0 : i32
    return %c0_i32, %c0_i32_0 : i32, i32
  }
  func.func @transform_6(%arg0: i32) -> (i32, i32) {
    %c0_i32 = arith.constant 0 : i32
    %c0_i32_0 = arith.constant 0 : i32
    %c0_i32_1 = arith.constant 0 : i32
    return %c0_i32, %c0_i32_0 : i32, i32
  }
  func.func @transform_7(%arg0: i32) -> (i32, i32) {
    %c0_i32 = arith.constant 0 : i32
    %c0_i32_0 = arith.constant 0 : i32
    return %arg0, %c0_i32 : i32, i32
  }
}

</mosaic_0001>

<llo_original>
// kernel: neural_net_forward.1
$region0: #{neural_net_forward.1}
  #allocation0 [shape = 'u32[]', space=smem, size = 0x4, offset = 0x4, fixed_abs, tag = 'smem constant byte address 0x4 - core index']
  #allocation1 [shape = 'u32[72,128]{1,0:T(1,128)}', space=vmem, size = 0x9000, scoped, tag = 'internal scratch']
  %s0 = inlined_call_operand.vmem [shape: f32[8,784], index: 0, kind: input, shape index: {}]
  %s1 = inlined_call_operand.vmem [shape: bf16[784,128], index: 1, kind: input, shape index: {}]
  %s2 = inlined_call_operand.vmem [shape: f32[1,128], index: 2, kind: input, shape index: {}]
  %s3 = inlined_call_operand.vmem [shape: bf16[128,64], index: 3, kind: input, shape index: {}]
  %s4 = inlined_call_operand.vmem [shape: f32[1,64], index: 4, kind: input, shape index: {}]
  %s5 = inlined_call_operand.vmem [shape: bf16[64,10], index: 5, kind: input, shape index: {}]
  %s6 = inlined_call_operand.vmem [shape: f32[1,10], index: 6, kind: input, shape index: {}]
  %s7 = inlined_call_operand.hbm [shape: f32[8,10], index: 7, kind: output, shape index: {}]
  %s8 = sld [smem:[#allocation0]]
  $region38: #{neural_net_forward.1} parent=0
    _
  %s10 = ssub.s32 1, %s8
  %s11 = scalar_select 0, %s10, %s8
  $region1: #{neural_net_forward.1} parent=0
    #allocation2 [shape = 'u8[8192]{0}', space=vmem, size = 0x2000, scoped, tag = 'output window, operand 0, single buffered']
    #allocation3 [shape = 's32[1]{0}', space=sflag, size = 0x4, scoped, tag = 'scoped memory for neural_net_forward.1']
    %12 = vsyncpa [#allocation3], 0
    // Predicated region
    $region2: #{neural_net_forward.1} parent=1 // pred_check
      _
    $region3: #{neural_net_forward.1} parent=1 // pred_check_branch
      %14 = sbr.rel (0) target = $region5
    $region4: #{neural_net_forward.1} parent=1 // pred_region
      _
    $region5: #{neural_net_forward.1} parent=1 // pred_fallthru
      _
    // Predicated region
    $region6: #{neural_net_forward.1} parent=1 // pred_check
      _
    $region7: #{neural_net_forward.1} parent=1 // pred_check_branch
      %16 = sbr.rel (0) target = $region9
    $region8: #{neural_net_forward.1} parent=1 // pred_region
      _
    $region9: #{neural_net_forward.1} parent=1 // pred_fallthru
      _
    // Predicated region
    $region10: #{neural_net_forward.1} parent=1 // pred_check
      _
    $region11: #{neural_net_forward.1} parent=1 // pred_check_branch
      %18 = sbr.rel (0) target = $region13
    $region12: #{neural_net_forward.1} parent=1 // pred_region
      _
    $region13: #{neural_net_forward.1} parent=1 // pred_fallthru
      _
    // Predicated region
    $region14: #{neural_net_forward.1} parent=1 // pred_check
      _
    $region15: #{neural_net_forward.1} parent=1 // pred_check_branch
      %20 = sbr.rel (0) target = $region17
    $region16: #{neural_net_forward.1} parent=1 // pred_region
      _
    $region17: #{neural_net_forward.1} parent=1 // pred_fallthru
      _
    // Predicated region
    $region18: #{neural_net_forward.1} parent=1 // pred_check
      _
    $region19: #{neural_net_forward.1} parent=1 // pred_check_branch
      %22 = sbr.rel (0) target = $region21
    $region20: #{neural_net_forward.1} parent=1 // pred_region
      _
    $region21: #{neural_net_forward.1} parent=1 // pred_fallthru
      _
    // Predicated region
    $region22: #{neural_net_forward.1} parent=1 // pred_check
      _
    $region23: #{neural_net_forward.1} parent=1 // pred_check_branch
      %24 = sbr.rel (0) target = $region25
    $region24: #{neural_net_forward.1} parent=1 // pred_region
      _
    $region25: #{neural_net_forward.1} parent=1 // pred_fallthru
      _
    // Predicated region
    $region26: #{neural_net_forward.1} parent=1 // pred_check
      _
    $region27: #{neural_net_forward.1} parent=1 // pred_check_branch
      %26 = sbr.rel (0) target = $region29
    $region28: #{neural_net_forward.1} parent=1 // pred_region
      _
    $region29: #{neural_net_forward.1} parent=1 // pred_fallthru
      _
    %v28 = vld [vmem:[%s0] sm:$0xff]
    %v29 = vld [vmem:[%s0 + $0x8] sm:$0xff]
    %v30 = vld [vmem:[%s0 + $0x10] sm:$0xff]
    %v31 = vld [vmem:[%s0 + $0x18] sm:$0xff]
    %v32 = vld [vmem:[%s0 + $0x20] sm:$0xff]
    %v33 = vld [vmem:[%s0 + $0x28] sm:$0xff]
    %v34 = vld [vmem:[%s0 + $0x30] sm:$0xff]
    %v35 = vld [vmem:[%s0 + $0x38] sm:$0xff]
    %v36 = vld [vmem:[%s0 + $0x40] sm:$0xff]
    %v37 = vld [vmem:[%s0 + $0x48] sm:$0xff]
    %v38 = vld [vmem:[%s0 + $0x50] sm:$0xff]
    %v39 = vld [vmem:[%s0 + $0x58] sm:$0xff]
    %v40 = vld [vmem:[%s0 + $0x60] sm:$0xff]
    %v41 = vld [vmem:[%s0 + $0x68] sm:$0xff]
    %v42 = vpack.c.bf16 %v35, %v28
    %v43 = vpack.c.bf16 %v36, %v29
    %v44 = vpack.c.bf16 %v37, %v30
    %v45 = vpack.c.bf16 %v38, %v31
    %v46 = vpack.c.bf16 %v39, %v32
    %v47 = vpack.c.bf16 %v40, %v33
    %v48 = vpack.c.bf16 %v41, %v34
    %v49 = vld [vmem:[%s1] sm:$0xf]
    %v50 = vld [vmem:[%s1 + $0x4] sm:$0xf]
    %v51 = vld [vmem:[%s1 + $0x8] sm:$0xf]
    %v52 = vld [vmem:[%s1 + $0xc] sm:$0xf]
    %v53 = vld [vmem:[%s1 + $0x10] sm:$0xf]
    %v54 = vld [vmem:[%s1 + $0x14] sm:$0xf]
    %v55 = vld [vmem:[%s1 + $0x18] sm:$0xf]
    %v56 = vld [vmem:[%s1 + $0x1c] sm:$0xf]
    %v57 = vld [vmem:[%s1 + $0x20] sm:$0xf]
    %v58 = vld [vmem:[%s1 + $0x24] sm:$0xf]
    %v59 = vld [vmem:[%s1 + $0x28] sm:$0xf]
    %v60 = vld [vmem:[%s1 + $0x2c] sm:$0xf]
    %v61 = vld [vmem:[%s1 + $0x30] sm:$0xf]
    %v62 = vld [vmem:[%s1 + $0x34] sm:$0xf]
    %v63 = vld [vmem:[%s1 + $0x38] sm:$0xf]
    %v64 = vld [vmem:[%s1 + $0x3c] sm:$0xf]
    %v65 = vld [vmem:[%s1 + $0x40] sm:$0xf]
    %v66 = vld [vmem:[%s1 + $0x44] sm:$0xf]
    %v67 = vld [vmem:[%s1 + $0x48] sm:$0xf]
    %v68 = vld [vmem:[%s1 + $0x4c] sm:$0xf]
    %v69 = vld [vmem:[%s1 + $0x50] sm:$0xf]
    %v70 = vld [vmem:[%s1 + $0x54] sm:$0xf]
    %v71 = vld [vmem:[%s1 + $0x58] sm:$0xf]
    %v72 = vld [vmem:[%s1 + $0x5c] sm:$0xf]
    %v73 = vld [vmem:[%s1 + $0x60] sm:$0xf]
    %v74 = vld [vmem:[%s1 + $0x64] sm:$0xf]
    %v75 = vld [vmem:[%s1 + $0x68] sm:$0xf]
    %v76 = vld [vmem:[%s1 + $0x6c] sm:$0xf]
    %v77 = vld [vmem:[%s1 + $0x70] sm:$0xf]
    %v78 = vld [vmem:[%s1 + $0x74] sm:$0xf]
    %v79 = vld [vmem:[%s1 + $0x78] sm:$0xf]
    %v80 = vld [vmem:[%s1 + $0x7c] sm:$0xf]
    %v81 = vld [vmem:[%s1 + $0x80] sm:$0xf]
    %v82 = vld [vmem:[%s1 + $0x84] sm:$0xf]
    %v83 = vld [vmem:[%s1 + $0x88] sm:$0xf]
    %v84 = vld [vmem:[%s1 + $0x8c] sm:$0xf]
    %v85 = vld [vmem:[%s1 + $0x90] sm:$0xf]
    %v86 = vld [vmem:[%s1 + $0x94] sm:$0xf]
    %v87 = vld [vmem:[%s1 + $0x98] sm:$0xf]
    %v88 = vld [vmem:[%s1 + $0x9c] sm:$0xf]
    %v89 = vld [vmem:[%s1 + $0xa0] sm:$0xf]
    %v90 = vld [vmem:[%s1 + $0xa4] sm:$0xf]
    %v91 = vld [vmem:[%s1 + $0xa8] sm:$0xf]
    %v92 = vld [vmem:[%s1 + $0xac] sm:$0xf]
    %v93 = vld [vmem:[%s1 + $0xb0] sm:$0xf]
    %v94 = vld [vmem:[%s1 + $0xb4] sm:$0xf]
    %v95 = vld [vmem:[%s1 + $0xb8] sm:$0xf]
    %v96 = vld [vmem:[%s1 + $0xbc] sm:$0xf]
    %v97 = vld [vmem:[%s1 + $0xc0] sm:$0xf]
    %v98 = vld [vmem:[%s1 + $0xc4] sm:$0xf]
    %v99 = vld [vmem:[%s1 + $0xc8] sm:$0xf]
    %v100 = vld [vmem:[%s1 + $0xcc] sm:$0xf]
    %v101 = vld [vmem:[%s1 + $0xd0] sm:$0xf]
    %v102 = vld [vmem:[%s1 + $0xd4] sm:$0xf]
    %v103 = vld [vmem:[%s1 + $0xd8] sm:$0xf]
    %v104 = vld [vmem:[%s1 + $0xdc] sm:$0xf]
    %v105 = vld [vmem:[%s1 + $0xe0] sm:$0xf]
    %v106 = vld [vmem:[%s1 + $0xe4] sm:$0xf]
    %v107 = vld [vmem:[%s1 + $0xe8] sm:$0xf]
    %v108 = vld [vmem:[%s1 + $0xec] sm:$0xf]
    %v109 = vld [vmem:[%s1 + $0xf0] sm:$0xf]
    %v110 = vld [vmem:[%s1 + $0xf4] sm:$0xf]
    %v111 = vld [vmem:[%s1 + $0xf8] sm:$0xf]
    %v112 = vld [vmem:[%s1 + $0xfc] sm:$0xf]
    %v113 = vld [vmem:[%s1 + $0x100] sm:$0xf]
    %v114 = vld [vmem:[%s1 + $0x104] sm:$0xf]
    %v115 = vld [vmem:[%s1 + $0x108] sm:$0xf]
    %v116 = vld [vmem:[%s1 + $0x10c] sm:$0xf]
    %v117 = vld [vmem:[%s1 + $0x110] sm:$0xf]
    %v118 = vld [vmem:[%s1 + $0x114] sm:$0xf]
    %v119 = vld [vmem:[%s1 + $0x118] sm:$0xf]
    %v120 = vld [vmem:[%s1 + $0x11c] sm:$0xf]
    %v121 = vld [vmem:[%s1 + $0x120] sm:$0xf]
    %v122 = vld [vmem:[%s1 + $0x124] sm:$0xf]
    %v123 = vld [vmem:[%s1 + $0x128] sm:$0xf]
    %v124 = vld [vmem:[%s1 + $0x12c] sm:$0xf]
    %v125 = vld [vmem:[%s1 + $0x130] sm:$0xf]
    %v126 = vld [vmem:[%s1 + $0x134] sm:$0xf]
    %v127 = vld [vmem:[%s1 + $0x138] sm:$0xf]
    %v128 = vld [vmem:[%s1 + $0x13c] sm:$0xf]
    %v129 = vld [vmem:[%s1 + $0x140] sm:$0xf]
    %v130 = vld [vmem:[%s1 + $0x144] sm:$0xf]
    %v131 = vld [vmem:[%s1 + $0x148] sm:$0xf]
    %v132 = vld [vmem:[%s1 + $0x14c] sm:$0xf]
    %v133 = vld [vmem:[%s1 + $0x150] sm:$0xf]
    %v134 = vld [vmem:[%s1 + $0x154] sm:$0xf]
    %v135 = vld [vmem:[%s1 + $0x158] sm:$0xf]
    %v136 = vld [vmem:[%s1 + $0x15c] sm:$0xf]
    %v137 = vld [vmem:[%s1 + $0x160] sm:$0xf]
    %v138 = vld [vmem:[%s1 + $0x164] sm:$0xf]
    %v139 = vld [vmem:[%s1 + $0x168] sm:$0xf]
    %v140 = vld [vmem:[%s1 + $0x16c] sm:$0xf]
    %v141 = vld [vmem:[%s1 + $0x170] sm:$0xf]
    %v142 = vld [vmem:[%s1 + $0x174] sm:$0xf]
    %v143 = vld [vmem:[%s1 + $0x178] sm:$0xf]
    %v144 = vld [vmem:[%s1 + $0x17c] sm:$0xf]
    %v145 = vld [vmem:[%s1 + $0x180] sm:$0xf]
    %v146 = vld [vmem:[%s1 + $0x184] sm:$0xf]
    %v147 = vld [vmem:[%s2] sm:$0x1]
    %v149 = vperm.slane %v147, 0
    %v249 = vunpack.c.l.b16 %v49
    %v250 = vunpack.c.l.b16 %v50
    %v251 = vunpack.c.l.b16 %v51
    %v252 = vunpack.c.l.b16 %v52
    %v253 = vunpack.c.l.b16 %v53
    %v254 = vunpack.c.l.b16 %v54
    %v255 = vunpack.c.l.b16 %v55
    %v256 = vunpack.c.l.b16 %v56
    %v257 = vunpack.c.l.b16 %v57
    %v258 = vunpack.c.l.b16 %v58
    %v259 = vunpack.c.l.b16 %v59
    %v260 = vunpack.c.l.b16 %v60
    %v261 = vunpack.c.l.b16 %v61
    %v262 = vunpack.c.l.b16 %v62
    %v263 = vunpack.c.l.b16 %v63
    %v264 = vunpack.c.l.b16 %v64
    %v265 = vunpack.c.l.b16 %v65
    %v266 = vunpack.c.l.b16 %v66
    %v267 = vunpack.c.l.b16 %v67
    %v268 = vunpack.c.l.b16 %v68
    %v269 = vunpack.c.l.b16 %v69
    %v270 = vunpack.c.l.b16 %v70
    %v271 = vunpack.c.l.b16 %v71
    %v272 = vunpack.c.l.b16 %v72
    %v273 = vunpack.c.l.b16 %v73
    %v274 = vunpack.c.l.b16 %v74
    %v275 = vunpack.c.l.b16 %v75
    %v276 = vunpack.c.l.b16 %v76
    %v277 = vunpack.c.l.b16 %v77
    %v278 = vunpack.c.l.b16 %v78
    %v279 = vunpack.c.l.b16 %v79
    %v280 = vunpack.c.l.b16 %v80
    %v281 = vunpack.c.l.b16 %v81
    %v282 = vunpack.c.l.b16 %v82
    %v283 = vunpack.c.l.b16 %v83
    %v284 = vunpack.c.l.b16 %v84
    %v285 = vunpack.c.l.b16 %v85
    %v286 = vunpack.c.l.b16 %v86
    %v287 = vunpack.c.l.b16 %v87
    %v288 = vunpack.c.l.b16 %v88
    %v289 = vunpack.c.l.b16 %v89
    %v290 = vunpack.c.l.b16 %v90
    %v291 = vunpack.c.l.b16 %v91
    %v292 = vunpack.c.l.b16 %v92
    %v293 = vunpack.c.l.b16 %v93
    %v294 = vunpack.c.l.b16 %v94
    %v295 = vunpack.c.l.b16 %v95
    %v296 = vunpack.c.l.b16 %v96
    %v297 = vunpack.c.l.b16 %v97
    %v298 = vunpack.c.l.b16 %v98
    %v299 = vunpack.c.l.b16 %v99
    %v300 = vunpack.c.l.b16 %v100
    %v301 = vunpack.c.l.b16 %v101
    %v302 = vunpack.c.l.b16 %v102
    %v303 = vunpack.c.l.b16 %v103
    %v304 = vunpack.c.l.b16 %v104
    %v305 = vunpack.c.l.b16 %v105
    %v306 = vunpack.c.l.b16 %v106
    %v307 = vunpack.c.l.b16 %v107
    %v308 = vunpack.c.l.b16 %v108
    %v309 = vunpack.c.l.b16 %v109
    %v310 = vunpack.c.l.b16 %v110
    %v311 = vunpack.c.l.b16 %v111
    %v312 = vunpack.c.l.b16 %v112
    %v313 = vunpack.c.l.b16 %v113
    %v314 = vunpack.c.l.b16 %v114
    %v315 = vunpack.c.l.b16 %v115
    %v316 = vunpack.c.l.b16 %v116
    %v317 = vunpack.c.l.b16 %v117
    %v318 = vunpack.c.l.b16 %v118
    %v319 = vunpack.c.l.b16 %v119
    %v320 = vunpack.c.l.b16 %v120
    %v321 = vunpack.c.l.b16 %v121
    %v322 = vunpack.c.l.b16 %v122
    %v323 = vunpack.c.l.b16 %v123
    %v324 = vunpack.c.l.b16 %v124
    %v325 = vunpack.c.l.b16 %v125
    %v326 = vunpack.c.l.b16 %v126
    %v327 = vunpack.c.l.b16 %v127
    %v328 = vunpack.c.l.b16 %v128
    %v329 = vunpack.c.l.b16 %v129
    %v330 = vunpack.c.l.b16 %v130
    %v331 = vunpack.c.l.b16 %v131
    %v332 = vunpack.c.l.b16 %v132
    %v333 = vunpack.c.l.b16 %v133
    %v334 = vunpack.c.l.b16 %v134
    %v335 = vunpack.c.l.b16 %v135
    %v336 = vunpack.c.l.b16 %v136
    %v337 = vunpack.c.l.b16 %v137
    %v338 = vunpack.c.l.b16 %v138
    %v339 = vunpack.c.l.b16 %v139
    %v340 = vunpack.c.l.b16 %v140
    %v341 = vunpack.c.l.b16 %v141
    %v342 = vunpack.c.l.b16 %v142
    %v343 = vunpack.c.l.b16 %v143
    %v344 = vunpack.c.l.b16 %v144
    %v345 = vunpack.c.l.b16 %v145
    %v346 = vunpack.c.l.b16 %v146
    %v347 = vpack.c.b16 %v250, %v249
    %v348 = vpack.c.b16 %v252, %v251
    %v349 = vpack.c.b16 %v254, %v253
    %v350 = vpack.c.b16 %v256, %v255
    %v351 = vpack.c.b16 %v258, %v257
    %v352 = vpack.c.b16 %v260, %v259
    %v353 = vpack.c.b16 %v262, %v261
    %v354 = vpack.c.b16 %v264, %v263
    %v355 = vpack.c.b16 %v266, %v265
    %v356 = vpack.c.b16 %v268, %v267
    %v357 = vpack.c.b16 %v270, %v269
    %v358 = vpack.c.b16 %v272, %v271
    %v359 = vpack.c.b16 %v274, %v273
    %v360 = vpack.c.b16 %v276, %v275
    %v361 = vpack.c.b16 %v278, %v277
    %v362 = vpack.c.b16 %v280, %v279
    %v363 = vpack.c.b16 %v282, %v281
    %v364 = vpack.c.b16 %v284, %v283
    %v365 = vpack.c.b16 %v286, %v285
    %v366 = vpack.c.b16 %v288, %v287
    %v367 = vpack.c.b16 %v290, %v289
    %v368 = vpack.c.b16 %v292, %v291
    %v369 = vpack.c.b16 %v294, %v293
    %v370 = vpack.c.b16 %v296, %v295
    %v371 = vpack.c.b16 %v298, %v297
    %v372 = vpack.c.b16 %v300, %v299
    %v373 = vpack.c.b16 %v302, %v301
    %v374 = vpack.c.b16 %v304, %v303
    %v375 = vpack.c.b16 %v306, %v305
    %v376 = vpack.c.b16 %v308, %v307
    %v377 = vpack.c.b16 %v310, %v309
    %v378 = vpack.c.b16 %v312, %v311
    %v379 = vpack.c.b16 %v314, %v313
    %v380 = vpack.c.b16 %v316, %v315
    %v381 = vpack.c.b16 %v318, %v317
    %v382 = vpack.c.b16 %v320, %v319
    %v383 = vpack.c.b16 %v322, %v321
    %v384 = vpack.c.b16 %v324, %v323
    %v385 = vpack.c.b16 %v326, %v325
    %v386 = vpack.c.b16 %v328, %v327
    %v387 = vpack.c.b16 %v330, %v329
    %v388 = vpack.c.b16 %v332, %v331
    %v389 = vpack.c.b16 %v334, %v333
    %v390 = vpack.c.b16 %v336, %v335
    %v391 = vpack.c.b16 %v338, %v337
    %v392 = vpack.c.b16 %v340, %v339
    %v393 = vpack.c.b16 %v342, %v341
    %v394 = vpack.c.b16 %v344, %v343
    %v395 = vpack.c.b16 %v346, %v345
    %vm445 = vcmask 130048
    %v447 = vsel %vm445, %v48, 0
    %449 = vmatpush.bf16.msra.mxu0 %v354
    %450 = vmatpush.bf16.msra.mxu0 %v353
    %451 = vmatpush.bf16.msra.mxu0 %v352
    %452 = vmatpush.bf16.msra.mxu0 %v351
    %453 = vmatpush.bf16.msra.mxu0 %v350
    %454 = vmatpush.bf16.msra.mxu0 %v349
    %455 = vmatpush.bf16.msra.mxu0 %v348
    %456 = vmatpush.bf16.msra.mxu0 %v347
    %457 = vmatmul.bf16.gmra.mxu0 %v42
    %v458 = vpop.f32.mrf.mxu0
    %v459 = vadd.f32 %v149, %v458
    %v460 = vpop.f32.mrf.mxu0
    %v461 = vadd.f32 %v149, %v460
    %462 = vdwg.mxu0
    %463 = vmatpush.bf16.msra.mxu0 %v362
    %464 = vmatpush.bf16.msra.mxu0 %v361
    %465 = vmatpush.bf16.msra.mxu0 %v360
    %466 = vmatpush.bf16.msra.mxu0 %v359
    %467 = vmatpush.bf16.msra.mxu0 %v358
    %468 = vmatpush.bf16.msra.mxu0 %v357
    %469 = vmatpush.bf16.msra.mxu0 %v356
    %470 = vmatpush.bf16.msra.mxu0 %v355
    %471 = vmatmul.bf16.gmra.mxu0 %v43
    %v472 = vpop.f32.mrf.mxu0
    %v473 = vadd.f32 %v459, %v472
    %v474 = vpop.f32.mrf.mxu0
    %v475 = vadd.f32 %v461, %v474
    %476 = vdwg.mxu0
    %477 = vmatpush.bf16.msra.mxu0 %v370
    %478 = vmatpush.bf16.msra.mxu0 %v369
    %479 = vmatpush.bf16.msra.mxu0 %v368
    %480 = vmatpush.bf16.msra.mxu0 %v367
    %481 = vmatpush.bf16.msra.mxu0 %v366
    %482 = vmatpush.bf16.msra.mxu0 %v365
    %483 = vmatpush.bf16.msra.mxu0 %v364
    %484 = vmatpush.bf16.msra.mxu0 %v363
    %485 = vmatmul.bf16.gmra.mxu0 %v44
    %v486 = vpop.f32.mrf.mxu0
    %v487 = vadd.f32 %v473, %v486
    %v488 = vpop.f32.mrf.mxu0
    %v489 = vadd.f32 %v475, %v488
    %490 = vdwg.mxu0
    %491 = vmatpush.bf16.msra.mxu0 %v378
    %492 = vmatpush.bf16.msra.mxu0 %v377
    %493 = vmatpush.bf16.msra.mxu0 %v376
    %494 = vmatpush.bf16.msra.mxu0 %v375
    %495 = vmatpush.bf16.msra.mxu0 %v374
    %496 = vmatpush.bf16.msra.mxu0 %v373
    %497 = vmatpush.bf16.msra.mxu0 %v372
    %498 = vmatpush.bf16.msra.mxu0 %v371
    %499 = vmatmul.bf16.gmra.mxu0 %v45
    %v500 = vpop.f32.mrf.mxu0
    %v501 = vadd.f32 %v487, %v500
    %v502 = vpop.f32.mrf.mxu0
    %v503 = vadd.f32 %v489, %v502
    %504 = vdwg.mxu0
    %505 = vmatpush.bf16.msra.mxu0 %v386
    %506 = vmatpush.bf16.msra.mxu0 %v385
    %507 = vmatpush.bf16.msra.mxu0 %v384
    %508 = vmatpush.bf16.msra.mxu0 %v383
    %509 = vmatpush.bf16.msra.mxu0 %v382
    %510 = vmatpush.bf16.msra.mxu0 %v381
    %511 = vmatpush.bf16.msra.mxu0 %v380
    %512 = vmatpush.bf16.msra.mxu0 %v379
    %513 = vmatmul.bf16.gmra.mxu0 %v46
    %v514 = vpop.f32.mrf.mxu0
    %v515 = vadd.f32 %v501, %v514
    %v516 = vpop.f32.mrf.mxu0
    %v517 = vadd.f32 %v503, %v516
    %518 = vdwg.mxu0
    %519 = vmatpush.bf16.msra.mxu0 %v394
    %520 = vmatpush.bf16.msra.mxu0 %v393
    %521 = vmatpush.bf16.msra.mxu0 %v392
    %522 = vmatpush.bf16.msra.mxu0 %v391
    %523 = vmatpush.bf16.msra.mxu0 %v390
    %524 = vmatpush.bf16.msra.mxu0 %v389
    %525 = vmatpush.bf16.msra.mxu0 %v388
    %526 = vmatpush.bf16.msra.mxu0 %v387
    %527 = vmatmul.bf16.gmra.mxu0 %v47
    %v528 = vpop.f32.mrf.mxu0
    %v529 = vadd.f32 %v515, %v528
    %v530 = vpop.f32.mrf.mxu0
    %v531 = vadd.f32 %v517, %v530
    %532 = vdwg.mxu0
    %533 = vmatpush.bf16.msra.mxu0 0
    %534 = vmatpush.bf16.msra.mxu0 0
    %535 = vmatpush.bf16.msra.mxu0 0
    %536 = vmatpush.bf16.msra.mxu0 0
    %537 = vmatpush.bf16.msra.mxu0 0
    %538 = vmatpush.bf16.msra.mxu0 0
    %539 = vmatpush.bf16.msra.mxu0 0
    %540 = vmatpush.bf16.msra.mxu0 %v395
    %541 = vmatmul.bf16.gmra.mxu0 %v447
    %v542 = vpop.f32.mrf.mxu0
    %v543 = vadd.f32 %v529, %v542
    %v544 = vpop.f32.mrf.mxu0
    %v545 = vadd.f32 %v531, %v544
    %546 = vdwg.mxu0
    %v547 = vmax.f32 %v543, 0.0
    %v548 = vmax.f32 %v545, 0.0
    %v549 = vpack.c.bf16 %v548, %v547
    %v550 = vld [vmem:[%s3] sm:$0xf]
    %v551 = vld [vmem:[%s3 + $0x4] sm:$0xf]
    %v552 = vld [vmem:[%s3 + $0x8] sm:$0xf]
    %v553 = vld [vmem:[%s3 + $0xc] sm:$0xf]
    %v554 = vld [vmem:[%s3 + $0x10] sm:$0xf]
    %v555 = vld [vmem:[%s3 + $0x14] sm:$0xf]
    %v556 = vld [vmem:[%s3 + $0x18] sm:$0xf]
    %v557 = vld [vmem:[%s3 + $0x1c] sm:$0xf]
    %v558 = vld [vmem:[%s3 + $0x20] sm:$0xf]
    %v559 = vld [vmem:[%s3 + $0x24] sm:$0xf]
    %v560 = vld [vmem:[%s3 + $0x28] sm:$0xf]
    %v561 = vld [vmem:[%s3 + $0x2c] sm:$0xf]
    %v562 = vld [vmem:[%s3 + $0x30] sm:$0xf]
    %v563 = vld [vmem:[%s3 + $0x34] sm:$0xf]
    %v564 = vld [vmem:[%s3 + $0x38] sm:$0xf]
    %v565 = vld [vmem:[%s3 + $0x3c] sm:$0xf]
    %v566 = vld [vmem:[%s4] sm:$0x1]
    %v568 = vperm.slane %v566, 0
    %v586 = vunpack.c.l.b16 %v550
    %v587 = vunpack.c.l.b16 %v551
    %v588 = vunpack.c.l.b16 %v552
    %v589 = vunpack.c.l.b16 %v553
    %v590 = vunpack.c.l.b16 %v554
    %v591 = vunpack.c.l.b16 %v555
    %v592 = vunpack.c.l.b16 %v556
    %v593 = vunpack.c.l.b16 %v557
    %v594 = vunpack.c.l.b16 %v558
    %v595 = vunpack.c.l.b16 %v559
    %v596 = vunpack.c.l.b16 %v560
    %v597 = vunpack.c.l.b16 %v561
    %v598 = vunpack.c.l.b16 %v562
    %v599 = vunpack.c.l.b16 %v563
    %v600 = vunpack.c.l.b16 %v564
    %v601 = vunpack.c.l.b16 %v565
    %v602 = vpack.c.b16 %v587, %v586
    %v603 = vpack.c.b16 %v589, %v588
    %v604 = vpack.c.b16 %v591, %v590
    %v605 = vpack.c.b16 %v593, %v592
    %v606 = vpack.c.b16 %v595, %v594
    %v607 = vpack.c.b16 %v597, %v596
    %v608 = vpack.c.b16 %v599, %v598
    %v609 = vpack.c.b16 %v601, %v600
    %618 = vmatpush.bf16.msra.mxu0 %v609
    %619 = vmatpush.bf16.msra.mxu0 %v608
    %620 = vmatpush.bf16.msra.mxu0 %v607
    %621 = vmatpush.bf16.msra.mxu0 %v606
    %622 = vmatpush.bf16.msra.mxu0 %v605
    %623 = vmatpush.bf16.msra.mxu0 %v604
    %624 = vmatpush.bf16.msra.mxu0 %v603
    %625 = vmatpush.bf16.msra.mxu0 %v602
    %626 = vmatmul.bf16.gmra.mxu0 %v549
    %v627 = vpop.f32.mrf.mxu0
    %v628 = vadd.f32 %v568, %v627
    %v629 = vpop.f32.mrf.mxu0
    %v630 = vadd.f32 %v568, %v629
    %631 = vdwg.mxu0
    %v632 = vmax.f32 %v628, 0.0
    %v633 = vmax.f32 %v630, 0.0
    %v634 = vpack.c.bf16 %v633, %v632
    %v635 = vld [vmem:[%s5] sm:$0xf]
    %v636 = vld [vmem:[%s5 + $0x4] sm:$0xf]
    %v637 = vld [vmem:[%s5 + $0x8] sm:$0xf]
    %v638 = vld [vmem:[%s5 + $0xc] sm:$0xf]
    %v639 = vld [vmem:[%s5 + $0x10] sm:$0xf]
    %v640 = vld [vmem:[%s5 + $0x14] sm:$0xf]
    %v641 = vld [vmem:[%s5 + $0x18] sm:$0xf]
    %v642 = vld [vmem:[%s5 + $0x1c] sm:$0xf]
    %v643 = vld [vmem:[%s6] sm:$0x1]
    %v645 = vperm.slane %v643, 0
    %v655 = vunpack.c.l.b16 %v635
    %v656 = vunpack.c.l.b16 %v636
    %v657 = vunpack.c.l.b16 %v637
    %v658 = vunpack.c.l.b16 %v638
    %v659 = vunpack.c.l.b16 %v639
    %v660 = vunpack.c.l.b16 %v640
    %v661 = vunpack.c.l.b16 %v641
    %v662 = vunpack.c.l.b16 %v642
    %v663 = vpack.c.b16 %v656, %v655
    %v664 = vpack.c.b16 %v658, %v657
    %v665 = vpack.c.b16 %v660, %v659
    %v666 = vpack.c.b16 %v662, %v661
    %vm671 = vcmask 523264
    %v673 = vsel %vm671, %v634, 0
    %675 = vmatpush.bf16.msra.mxu0 0
    %676 = vmatpush.bf16.msra.mxu0 0
    %677 = vmatpush.bf16.msra.mxu0 0
    %678 = vmatpush.bf16.msra.mxu0 0
    %679 = vmatpush.bf16.msra.mxu0 %v666
    %680 = vmatpush.bf16.msra.mxu0 %v665
    %681 = vmatpush.bf16.msra.mxu0 %v664
    %682 = vmatpush.bf16.msra.mxu0 %v663
    %683 = vmatmul.bf16.gmra.mxu0 %v673
    %v684 = vpop.f32.mrf.mxu0
    %v685 = vadd.f32 %v645, %v684
    %v686 = vpop.f32.mrf.mxu0
    %v687 = vadd.f32 %v645, %v686
    %688 = vdwg.mxu0
    %vm689 = vcmask 80896
    %690 = vst.msk [vmem:[#allocation2] sm:$0xff] %vm689, %v685
    %691 = vst.msk [vmem:[#allocation2 + $0x8] sm:$0xff] %vm689, %v687
    // Predicated region
    $region30: #{neural_net_forward.1} parent=1 // pred_check
      _
    $region31: #{neural_net_forward.1} parent=1 // pred_check_branch
      %693 = sbr.rel (0) target = $region33
    $region32: #{neural_net_forward.1} parent=1 // pred_region
      %695 = vsyncadd [#allocation3], 128
      %s696 = sshll.u32 [#allocation2], 4
      %s697 = int_to_ptr.vmem [resolvable:$true] %s696
      %s698 = sshll.u32 %s7, 4
      %s699 = int_to_ptr.hbm [resolvable:$true] %s698
      %704 = dma.vmem_to_hbm [thread:$0]  %s697, 128, %s699, [#allocation3], 128, 128, 8
    $region33: #{neural_net_forward.1} parent=1 // pred_fallthru
      _
    // Predicated region
    $region34: #{neural_net_forward.1} parent=1 // pred_check
      _
    $region35: #{neural_net_forward.1} parent=1 // pred_check_branch
      %706 = sbr.rel (0) target = $region37
    $region36: #{neural_net_forward.1} parent=1 // pred_region
      %708 = dma.done [#allocation3], 256
    $region37: #{neural_net_forward.1} parent=1 // pred_fallthru
      _
    %709 = vsyncpa [#allocation3], 1

</llo_original>
